<compile_context>
chip_gen: v7x
topology: tpu7x:2x2x1
jax: 0.10.0
libtpu: 0.0.40
codegen_flags: <defaults>
</compile_context>

<pallas_src>
import functools

import jax
import jax.numpy as jnp
from jax.experimental import pallas as pl
from jax.experimental.pallas import tpu as pltpu


HIDDEN = 256
W4_PAD = 128   # fc4 weight zero-padded to 128 output lanes (true width 1)


def _round_up(x, m):
    return ((x + m - 1) // m) * m


def _qnet_kernel(x_ref, w1_ref, b1_ref, w2_ref, b2_ref, w3_ref, b3_ref,
                 w4_ref, b4_ref, o_ref):
    # fc1 (fused obs||act input) + bias + relu
    h = jnp.dot(x_ref[...], w1_ref[...], preferred_element_type=jnp.float32)
    h = jnp.maximum(h + b1_ref[...], 0.0).astype(jnp.bfloat16)
    # fc2 + relu
    h = jnp.dot(h, w2_ref[...], preferred_element_type=jnp.float32)
    h = jnp.maximum(h + b2_ref[...], 0.0).astype(jnp.bfloat16)
    # fc3 + relu
    h = jnp.dot(h, w3_ref[...], preferred_element_type=jnp.float32)
    h = jnp.maximum(h + b3_ref[...], 0.0).astype(jnp.bfloat16)
    # fc4: weight padded to 128 lanes for the MXU; only column 0 is real.
    q = jnp.dot(h, w4_ref[...], preferred_element_type=jnp.float32)
    # Slim (tile, 1) store — no 128-lane padded f32 writeback to HBM.
    o_ref[...] = q[:, 0:1] + b4_ref[...]


def _choose_tile(batch, max_batch_tile):
    if batch <= 256:
        # Whole batch in a single grid step.
        return max(_round_up(batch, 16), 16)
    if batch <= 2 * max_batch_tile:
        # Exactly two grid steps so dimension_semantics=("parallel",) can
        # shard the batch across both v7x TensorCores.
        return _round_up(-(-batch // 2), 16)
    return max_batch_tile


@functools.partial(jax.jit, static_argnames=("max_batch_tile",))
def soft_q_forward(obs_plus_lambda, act, params, *, max_batch_tile=1024):
    """Q(obs_plus_lambda, act) -> [B, 1] float32."""
    w1, b1, w2, b2, w3, b3, w4, b4 = params
    B, d_obs = obs_plus_lambda.shape
    d_act = act.shape[1]
    d_in = d_obs + d_act

    tile = _choose_tile(B, max_batch_tile)
    B_pad = _round_up(B, tile)

    # One small fused XLA op: concat -> bf16 (and zero-pad the batch only if
    # needed).  Padded rows produce garbage Q values that are sliced off below.
    x = jnp.concatenate([obs_plus_lambda, act], axis=1).astype(jnp.bfloat16)
    if B_pad != B:
        x = jnp.pad(x, ((0, B_pad - B), (0, 0)))

    grid = (B_pad // tile,)

    flops = 2 * B_pad * (d_in * HIDDEN + 2 * HIDDEN * HIDDEN + HIDDEN * W4_PAD)
    bytes_accessed = (
        B_pad * d_in * 2                                                 # bf16 input
        + (d_in * HIDDEN + 2 * HIDDEN * HIDDEN + HIDDEN * W4_PAD) * 2    # bf16 weights
        + (3 * HIDDEN + 1) * 4                                           # f32 biases
        + B_pad * 4)                                                     # f32 output (1 lane)

    in_specs = [
        pl.BlockSpec((tile, d_in), lambda i: (i, 0)),       # x = obs || act
        pl.BlockSpec((d_in, HIDDEN), lambda i: (0, 0)),     # w1
        pl.BlockSpec((1, HIDDEN), lambda i: (0, 0)),        # b1
        pl.BlockSpec((HIDDEN, HIDDEN), lambda i: (0, 0)),   # w2
        pl.BlockSpec((1, HIDDEN), lambda i: (0, 0)),        # b2
        pl.BlockSpec((HIDDEN, HIDDEN), lambda i: (0, 0)),   # w3
        pl.BlockSpec((1, HIDDEN), lambda i: (0, 0)),        # b3
        pl.BlockSpec((HIDDEN, W4_PAD), lambda i: (0, 0)),   # w4 (zero-padded lanes)
        pl.BlockSpec((1, 1), lambda i: (0, 0)),             # b4 (scalar bias)
    ]
    out_spec = pl.BlockSpec((tile, 1), lambda i: (i, 0))

    q_pad = pl.pallas_call(
        _qnet_kernel,
        out_shape=jax.ShapeDtypeStruct((B_pad, 1), jnp.float32),
        grid=grid,
        in_specs=in_specs,
        out_specs=out_spec,
        compiler_params=pltpu.CompilerParams(
            dimension_semantics=("parallel",)),          # megacore-shardable batch
        cost_estimate=pl.CostEstimate(
            flops=flops, transcendentals=0, bytes_accessed=bytes_accessed),
    )(x, w1, b1, w2, b2, w3, b3, w4, b4)

    return q_pad[:B] if B_pad != B else q_pad


def init_params(key, obs_dim_plus_1, act_dim):
    """nn.Linear-style init (uniform +/- 1/sqrt(fan_in)).

    Weights are stored [in, out] (transposed vs. PyTorch), kept in bf16
    (biases f32).  fc4's weight is zero-padded to 128 output lanes; its bias
    stays a (1, 1) scalar.
    """
    def linear(k, fan_in, fan_out):
        kw, kb = jax.random.split(k)
        bound = 1.0 / jnp.sqrt(fan_in)
        w = jax.random.uniform(kw, (fan_in, fan_out), jnp.float32, -bound, bound)
        b = jax.random.uniform(kb, (1, fan_out), jnp.float32, -bound, bound)
        return w, b

    d_in = obs_dim_plus_1 + act_dim
    k1, k2, k3, k4 = jax.random.split(key, 4)
    w1, b1 = linear(k1, d_in, HIDDEN)
    w2, b2 = linear(k2, HIDDEN, HIDDEN)
    w3, b3 = linear(k3, HIDDEN, HIDDEN)
    w4, b4 = linear(k4, HIDDEN, 1)

    w4p = jnp.pad(w4, ((0, 0), (0, W4_PAD - 1)))   # lane-dense MXU push

    return (w1.astype(jnp.bfloat16), b1,
            w2.astype(jnp.bfloat16), b2,
            w3.astype(jnp.bfloat16), b3,
            w4p.astype(jnp.bfloat16), b4)


def reference_forward(obs_plus_lambda, act, params):
    """Pure-JAX reference using the same bf16-weight / f32-accumulate recipe."""
    w1, b1, w2, b2, w3, b3, w4, b4 = params
    x = jnp.concatenate([obs_plus_lambda, act], axis=1).astype(jnp.bfloat16)
    h = jax.nn.relu(
        jnp.dot(x, w1, preferred_element_type=jnp.float32) + b1
    ).astype(jnp.bfloat16)
    h = jax.nn.relu(
        jnp.dot(h, w2, preferred_element_type=jnp.float32) + b2
    ).astype(jnp.bfloat16)
    h = jax.nn.relu(
        jnp.dot(h, w3, preferred_element_type=jnp.float32) + b3
    ).astype(jnp.bfloat16)
    q = jnp.dot(h, w4, preferred_element_type=jnp.float32)
    return q[:, :1] + b4


if __name__ == "__main__":
    # Small shapes consistent with the module: obs_dim+1 = 17, act_dim = 6.
    obs_dim_plus_1 = 17
    act_dim = 6

    key = jax.random.PRNGKey(0)
    k_obs, k_act, k_params = jax.random.split(key, 3)
    params = init_params(k_params, obs_dim_plus_1, act_dim)

    # Case 1: tiny batch -> whole (padded-to-16) batch in a single grid step.
    B = 8
    obs_plus_lambda = jax.random.normal(k_obs, (B, obs_dim_plus_1), jnp.float32)
    act = jax.random.normal(k_act, (B, act_dim), jnp.float32)
    q = jax.block_until_ready(soft_q_forward(obs_plus_lambda, act, params))
    q_ref = reference_forward(obs_plus_lambda, act, params)
    assert q.shape == (B, 1)
    assert jnp.allclose(q, q_ref, atol=1e-2, rtol=1e-2), "mismatch vs reference (B=8)"

    # Case 2: moderate non-multiple batch -> two grid steps (exercises padding,
    # tiling and the v7x two-TensorCore split path).
    B2 = 300
    obs2 = jax.random.normal(jax.random.PRNGKey(1), (B2, obs_dim_plus_1), jnp.float32)
    act2 = jax.random.normal(jax.random.PRNGKey(2), (B2, act_dim), jnp.float32)
    q2 = jax.block_until_ready(soft_q_forward(obs2, act2, params))
    q2_ref = reference_forward(obs2, act2, params)
    assert q2.shape == (B2, 1)
    assert jnp.allclose(q2, q2_ref, atol=1e-2, rtol=1e-2), "mismatch vs reference (B=300)"

    print("KERNEL_OK")
</pallas_src>

<mosaic_0001>
module attributes {stable_mosaic.version = 11 : i64} {
  func.func @_qnet_kernel(%arg0: i32, %arg1: memref<16x23xbf16, #tpu.memory_space<vmem>>, %arg2: memref<23x256xbf16, #tpu.memory_space<vmem>>, %arg3: memref<1x256xf32, #tpu.memory_space<vmem>>, %arg4: memref<256x256xbf16, #tpu.memory_space<vmem>>, %arg5: memref<1x256xf32, #tpu.memory_space<vmem>>, %arg6: memref<256x256xbf16, #tpu.memory_space<vmem>>, %arg7: memref<1x256xf32, #tpu.memory_space<vmem>>, %arg8: memref<256x128xbf16, #tpu.memory_space<vmem>>, %arg9: memref<1x1xf32, #tpu.memory_space<vmem>>, %arg10: memref<16x1xf32, #tpu.memory_space<vmem>>) attributes {dimension_semantics = [#tpu.dimension_semantics<parallel>], iteration_bounds = array<i64: 1>, scalar_prefetch = 0 : i64, scratch_operands = 0 : i64, tpu.core_type = #tpu.core_type<tc>, window_params = [{transform_indices = @transform_0, window_bounds = array<i64: 16, 23>}, {pipeline_mode = #tpu.pipeline_mode<synchronous>, transform_indices = @transform_1, window_bounds = array<i64: 23, 256>}, {pipeline_mode = #tpu.pipeline_mode<synchronous>, transform_indices = @transform_2, window_bounds = array<i64: 1, 256>}, {pipeline_mode = #tpu.pipeline_mode<synchronous>, transform_indices = @transform_3, window_bounds = array<i64: 256, 256>}, {pipeline_mode = #tpu.pipeline_mode<synchronous>, transform_indices = @transform_4, window_bounds = array<i64: 1, 256>}, {pipeline_mode = #tpu.pipeline_mode<synchronous>, transform_indices = @transform_5, window_bounds = array<i64: 256, 256>}, {pipeline_mode = #tpu.pipeline_mode<synchronous>, transform_indices = @transform_6, window_bounds = array<i64: 1, 256>}, {pipeline_mode = #tpu.pipeline_mode<synchronous>, transform_indices = @transform_7, window_bounds = array<i64: 256, 128>}, {pipeline_mode = #tpu.pipeline_mode<synchronous>, transform_indices = @transform_8, window_bounds = array<i64: 1, 1>}, {transform_indices = @transform_9, window_bounds = array<i64: 16, 1>}]} {
    %c0 = arith.constant 0 : index
    %c0_0 = arith.constant 0 : index
    %0 = vector.load %arg1[%c0, %c0_0] : memref<16x23xbf16, #tpu.memory_space<vmem>>, vector<16x23xbf16>
    %c0_1 = arith.constant 0 : index
    %c0_2 = arith.constant 0 : index
    %1 = vector.load %arg2[%c0_1, %c0_2] : memref<23x256xbf16, #tpu.memory_space<vmem>>, vector<23x256xbf16>
    %cst = arith.constant dense<0.000000e+00> : vector<16x256xf32>
    %2 = tpu.matmul %0, %1, %cst {dimension_numbers = #tpu.dot_dimension_numbers<[1], [0], [0], [1], [0, 0, 1, 1], [], []>} : vector<16x23xbf16>, vector<23x256xbf16>, vector<16x256xf32> -> vector<16x256xf32>
    %c0_3 = arith.constant 0 : index
    %c0_4 = arith.constant 0 : index
    %3 = vector.load %arg3[%c0_3, %c0_4] : memref<1x256xf32, #tpu.memory_space<vmem>>, vector<1x256xf32>
    %4 = vector.broadcast %3 : vector<1x256xf32> to vector<16x256xf32>
    %5 = arith.addf %2, %4 : vector<16x256xf32>
    %cst_5 = arith.constant 0.000000e+00 : f32
    %6 = vector.broadcast %cst_5 : f32 to vector<16x256xf32>
    %7 = arith.maximumf %5, %6 : vector<16x256xf32>
    %8 = arith.truncf %7 : vector<16x256xf32> to vector<16x256xbf16>
    %c0_6 = arith.constant 0 : index
    %c0_7 = arith.constant 0 : index
    %9 = vector.load %arg4[%c0_6, %c0_7] : memref<256x256xbf16, #tpu.memory_space<vmem>>, vector<256x256xbf16>
    %cst_8 = arith.constant dense<0.000000e+00> : vector<16x256xf32>
    %10 = tpu.matmul %8, %9, %cst_8 {dimension_numbers = #tpu.dot_dimension_numbers<[1], [0], [0], [1], [0, 0, 1, 1], [], []>} : vector<16x256xbf16>, vector<256x256xbf16>, vector<16x256xf32> -> vector<16x256xf32>
    %c0_9 = arith.constant 0 : index
    %c0_10 = arith.constant 0 : index
    %11 = vector.load %arg5[%c0_9, %c0_10] : memref<1x256xf32, #tpu.memory_space<vmem>>, vector<1x256xf32>
    %12 = vector.broadcast %11 : vector<1x256xf32> to vector<16x256xf32>
    %13 = arith.addf %10, %12 : vector<16x256xf32>
    %cst_11 = arith.constant 0.000000e+00 : f32
    %14 = vector.broadcast %cst_11 : f32 to vector<16x256xf32>
    %15 = arith.maximumf %13, %14 : vector<16x256xf32>
    %16 = arith.truncf %15 : vector<16x256xf32> to vector<16x256xbf16>
    %c0_12 = arith.constant 0 : index
    %c0_13 = arith.constant 0 : index
    %17 = vector.load %arg6[%c0_12, %c0_13] : memref<256x256xbf16, #tpu.memory_space<vmem>>, vector<256x256xbf16>
    %cst_14 = arith.constant dense<0.000000e+00> : vector<16x256xf32>
    %18 = tpu.matmul %16, %17, %cst_14 {dimension_numbers = #tpu.dot_dimension_numbers<[1], [0], [0], [1], [0, 0, 1, 1], [], []>} : vector<16x256xbf16>, vector<256x256xbf16>, vector<16x256xf32> -> vector<16x256xf32>
    %c0_15 = arith.constant 0 : index
    %c0_16 = arith.constant 0 : index
    %19 = vector.load %arg7[%c0_15, %c0_16] : memref<1x256xf32, #tpu.memory_space<vmem>>, vector<1x256xf32>
    %20 = vector.broadcast %19 : vector<1x256xf32> to vector<16x256xf32>
    %21 = arith.addf %18, %20 : vector<16x256xf32>
    %cst_17 = arith.constant 0.000000e+00 : f32
    %22 = vector.broadcast %cst_17 : f32 to vector<16x256xf32>
    %23 = arith.maximumf %21, %22 : vector<16x256xf32>
    %24 = arith.truncf %23 : vector<16x256xf32> to vector<16x256xbf16>
    %c0_18 = arith.constant 0 : index
    %c0_19 = arith.constant 0 : index
    %25 = vector.load %arg8[%c0_18, %c0_19] : memref<256x128xbf16, #tpu.memory_space<vmem>>, vector<256x128xbf16>
    %cst_20 = arith.constant dense<0.000000e+00> : vector<16x128xf32>
    %26 = tpu.matmul %24, %25, %cst_20 {dimension_numbers = #tpu.dot_dimension_numbers<[1], [0], [0], [1], [0, 0, 1, 1], [], []>} : vector<16x256xbf16>, vector<256x128xbf16>, vector<16x128xf32> -> vector<16x128xf32>
    %27 = vector.extract_strided_slice %26 {offsets = [0, 0], sizes = [16, 1], strides = [1, 1]} : vector<16x128xf32> to vector<16x1xf32>
    %c0_21 = arith.constant 0 : index
    %c0_22 = arith.constant 0 : index
    %28 = vector.load %arg9[%c0_21, %c0_22] : memref<1x1xf32, #tpu.memory_space<vmem>>, vector<1x1xf32>
    %29 = vector.broadcast %28 : vector<1x1xf32> to vector<16x1xf32>
    %30 = arith.addf %27, %29 : vector<16x1xf32>
    %c0_23 = arith.constant 0 : index
    %c0_24 = arith.constant 0 : index
    %31 = vector.load %arg10[%c0_23, %c0_24] : memref<16x1xf32, #tpu.memory_space<vmem>>, vector<16x1xf32>
    tpu.vector_store %arg10[%c0_23, %c0_24], %30 {strides = array<i32>} : memref<16x1xf32, #tpu.memory_space<vmem>>, vector<16x1xf32>,
    return
  }
  func.func @transform_0(%arg0: i32) -> (i32, i32) {
    %c0_i32 = arith.constant 0 : i32
    %c0_i32_0 = arith.constant 0 : i32
    return %arg0, %c0_i32 : i32, i32
  }
  func.func @transform_1(%arg0: i32) -> (i32, i32) {
    %c0_i32 = arith.constant 0 : i32
    %c0_i32_0 = arith.constant 0 : i32
    %c0_i32_1 = arith.constant 0 : i32
    return %c0_i32, %c0_i32_0 : i32, i32
  }
  func.func @transform_2(%arg0: i32) -> (i32, i32) {
    %c0_i32 = arith.constant 0 : i32
    %c0_i32_0 = arith.constant 0 : i32
    %c0_i32_1 = arith.constant 0 : i32
    return %c0_i32, %c0_i32_0 : i32, i32
  }
  func.func @transform_3(%arg0: i32) -> (i32, i32) {
    %c0_i32 = arith.constant 0 : i32
    %c0_i32_0 = arith.constant 0 : i32
    %c0_i32_1 = arith.constant 0 : i32
    return %c0_i32, %c0_i32_0 : i32, i32
  }
  func.func @transform_4(%arg0: i32) -> (i32, i32) {
    %c0_i32 = arith.constant 0 : i32
    %c0_i32_0 = arith.constant 0 : i32
    %c0_i32_1 = arith.constant 0 : i32
    return %c0_i32, %c0_i32_0 : i32, i32
  }
  func.func @transform_5(%arg0: i32) -> (i32, i32) {
    %c0_i32 = arith.constant 0 : i32
    %c0_i32_0 = arith.constant 0 : i32
    %c0_i32_1 = arith.constant 0 : i32
    return %c0_i32, %c0_i32_0 : i32, i32
  }
  func.func @transform_6(%arg0: i32) -> (i32, i32) {
    %c0_i32 = arith.constant 0 : i32
    %c0_i32_0 = arith.constant 0 : i32
    %c0_i32_1 = arith.constant 0 : i32
    return %c0_i32, %c0_i32_0 : i32, i32
  }
  func.func @transform_7(%arg0: i32) -> (i32, i32) {
    %c0_i32 = arith.constant 0 : i32
    %c0_i32_0 = arith.constant 0 : i32
    %c0_i32_1 = arith.constant 0 : i32
    return %c0_i32, %c0_i32_0 : i32, i32
  }
  func.func @transform_8(%arg0: i32) -> (i32, i32) {
    %c0_i32 = arith.constant 0 : i32
    %c0_i32_0 = arith.constant 0 : i32
    %c0_i32_1 = arith.constant 0 : i32
    return %c0_i32, %c0_i32_0 : i32, i32
  }
  func.func @transform_9(%arg0: i32) -> (i32, i32) {
    %c0_i32 = arith.constant 0 : i32
    %c0_i32_0 = arith.constant 0 : i32
    return %arg0, %c0_i32 : i32, i32
  }
}

</mosaic_0001>

<llo_original>
// kernel: soft_q_forward.1
$region0: #{soft_q_forward.1}
  #allocation0 [shape = 'u32[]', space=smem, size = 0x4, offset = 0x4, fixed_abs, tag = 'smem constant byte address 0x4 - core index']
  #allocation1 [shape = 'u32[144,128]{1,0:T(1,128)}', space=vmem, size = 0x12000, scoped, tag = 'internal scratch']
  #allocation2 [shape = 'f32[1,1]{1,0:T(1,128)S(1)}', space=vmem, size = 0x200, scoped, tag = 'scoped memory for soft_q_forward.1']
  %s0 = inlined_call_operand.vmem [shape: bf16[16,23], index: 0, kind: input, shape index: {}]
  %s1 = inlined_call_operand.vmem [shape: bf16[23,256], index: 1, kind: input, shape index: {}]
  %s2 = inlined_call_operand.vmem [shape: f32[1,256], index: 2, kind: input, shape index: {}]
  %s3 = inlined_call_operand.hbm [shape: bf16[256,256], index: 3, kind: input, shape index: {}]
  %s4 = inlined_call_operand.vmem [shape: f32[1,256], index: 4, kind: input, shape index: {}]
  %s5 = inlined_call_operand.hbm [shape: bf16[256,256], index: 5, kind: input, shape index: {}]
  %s6 = inlined_call_operand.vmem [shape: f32[1,256], index: 6, kind: input, shape index: {}]
  %s7 = inlined_call_operand.hbm [shape: bf16[256,128], index: 7, kind: input, shape index: {}]
  %s8 = inlined_call_operand.<no memory space> [shape: f32[1,1], index: 8, kind: input, shape index: {}]
  %s9 = inlined_call_operand.vmem [shape: f32[16,1], index: 9, kind: output, shape index: {}]
  %s10 = sld [smem:[#allocation0]]
  $region58: #{soft_q_forward.1} parent=0
    _
  %s12 = ssub.s32 1, %s10
  %s13 = scalar_select 0, %s12, %s10
  %v14 = vstv %s8
  %15 = vst [vmem:[#allocation2] sm:$0x1] %v14
  $region1: #{soft_q_forward.1} parent=0
    #allocation3 [shape = 'u8[131072]{0}', space=vmem, size = 0x20000, scoped, tag = 'input window, operand 3, single buffered']
    #allocation4 [shape = 's32[1]{0}', space=sflag, size = 0x4, scoped, tag = 'scoped memory for soft_q_forward.1']
    #allocation5 [shape = 'u8[131072]{0}', space=vmem, size = 0x20000, scoped, tag = 'input window, operand 5, single buffered']
    #allocation6 [shape = 's32[1]{0}', space=sflag, size = 0x4, scoped, tag = 'scoped memory for soft_q_forward.1']
    #allocation7 [shape = 'u8[65536]{0}', space=vmem, size = 0x10000, scoped, tag = 'input window, operand 7, single buffered']
    %16 = vsyncpa [#allocation4], 0
    %17 = vsyncpa [#allocation6], 0
    // Predicated region
    $region2: #{soft_q_forward.1} parent=1 // pred_check
      _
    $region3: #{soft_q_forward.1} parent=1 // pred_check_branch
      %19 = sbr.rel (0) target = $region5
    $region4: #{soft_q_forward.1} parent=1 // pred_region
      _
    $region5: #{soft_q_forward.1} parent=1 // pred_fallthru
      _
    // Predicated region
    $region6: #{soft_q_forward.1} parent=1 // pred_check
      _
    $region7: #{soft_q_forward.1} parent=1 // pred_check_branch
      %21 = sbr.rel (0) target = $region9
    $region8: #{soft_q_forward.1} parent=1 // pred_region
      _
    $region9: #{soft_q_forward.1} parent=1 // pred_fallthru
      _
    // Predicated region
    $region10: #{soft_q_forward.1} parent=1 // pred_check
      _
    $region11: #{soft_q_forward.1} parent=1 // pred_check_branch
      %23 = sbr.rel (0) target = $region13
    $region12: #{soft_q_forward.1} parent=1 // pred_region
      _
    $region13: #{soft_q_forward.1} parent=1 // pred_fallthru
      _
    // Predicated region
    $region14: #{soft_q_forward.1} parent=1 // pred_check
      _
    $region15: #{soft_q_forward.1} parent=1 // pred_check_branch
      %25 = sbr.rel (0) target = $region17
    $region16: #{soft_q_forward.1} parent=1 // pred_region
      %s27 = ssub.s32 4096, 4096
      %28 = vsyncadd [#allocation4], %s27
      %s29 = sshll.u32 [#allocation3], 4
      %s30 = int_to_ptr.vmem [resolvable:$true] %s29
      %35 = dma.hbm_to_vmem [thread:$0]  %s3, 4096, %s30, [#allocation4], 128, 128, 8
    $region17: #{soft_q_forward.1} parent=1 // pred_fallthru
      _
    // Predicated region
    $region18: #{soft_q_forward.1} parent=1 // pred_check
      _
    $region19: #{soft_q_forward.1} parent=1 // pred_check_branch
      %37 = sbr.rel (0) target = $region21
    $region20: #{soft_q_forward.1} parent=1 // pred_region
      _
    $region21: #{soft_q_forward.1} parent=1 // pred_fallthru
      _
    // Predicated region
    $region22: #{soft_q_forward.1} parent=1 // pred_check
      _
    $region23: #{soft_q_forward.1} parent=1 // pred_check_branch
      %39 = sbr.rel (0) target = $region25
    $region24: #{soft_q_forward.1} parent=1 // pred_region
      %s41 = ssub.s32 4096, 4096
      %42 = vsyncadd [#allocation6], %s41
      %s43 = sshll.u32 [#allocation5], 4
      %s44 = int_to_ptr.vmem [resolvable:$true] %s43
      %49 = dma.hbm_to_vmem [thread:$0]  %s5, 4096, %s44, [#allocation6], 128, 128, 8
    $region25: #{soft_q_forward.1} parent=1 // pred_fallthru
      _
    // Predicated region
    $region26: #{soft_q_forward.1} parent=1 // pred_check
      _
    $region27: #{soft_q_forward.1} parent=1 // pred_check_branch
      %51 = sbr.rel (0) target = $region29
    $region28: #{soft_q_forward.1} parent=1 // pred_region
      _
    $region29: #{soft_q_forward.1} parent=1 // pred_fallthru
      _
    // Predicated region
    $region30: #{soft_q_forward.1} parent=1 // pred_check
      _
    $region31: #{soft_q_forward.1} parent=1 // pred_check_branch
      %53 = sbr.rel (0) target = $region33
    $region32: #{soft_q_forward.1} parent=1 // pred_region
      %s55 = ssub.s32 2048, 2048
      %56 = vsyncadd [#allocation6], %s55
      %s57 = sshll.u32 [#allocation7], 4
      %s58 = int_to_ptr.vmem [resolvable:$true] %s57
      %63 = dma.hbm_to_vmem [thread:$0]  %s7, 2048, %s58, [#allocation6], 64, 64, 4
    $region33: #{soft_q_forward.1} parent=1 // pred_fallthru
      _
    // Predicated region
    $region34: #{soft_q_forward.1} parent=1 // pred_check
      _
    $region35: #{soft_q_forward.1} parent=1 // pred_check_branch
      %65 = sbr.rel (0) target = $region37
    $region36: #{soft_q_forward.1} parent=1 // pred_region
      _
    $region37: #{soft_q_forward.1} parent=1 // pred_fallthru
      _
    // Predicated region
    $region38: #{soft_q_forward.1} parent=1 // pred_check
      _
    $region39: #{soft_q_forward.1} parent=1 // pred_check_branch
      %67 = sbr.rel (0) target = $region41
    $region40: #{soft_q_forward.1} parent=1 // pred_region
      %68 = dma.done [#allocation4], 4096
    $region41: #{soft_q_forward.1} parent=1 // pred_fallthru
      _
    // Predicated region
    $region42: #{soft_q_forward.1} parent=1 // pred_check
      _
    $region43: #{soft_q_forward.1} parent=1 // pred_check_branch
      %70 = sbr.rel (0) target = $region45
    $region44: #{soft_q_forward.1} parent=1 // pred_region
      %71 = dma.done [#allocation6], 4096
    $region45: #{soft_q_forward.1} parent=1 // pred_fallthru
      _
    // Predicated region
    $region46: #{soft_q_forward.1} parent=1 // pred_check
      _
    $region47: #{soft_q_forward.1} parent=1 // pred_check_branch
      %73 = sbr.rel (0) target = $region49
    $region48: #{soft_q_forward.1} parent=1 // pred_region
      %74 = dma.done [#allocation6], 2048
    $region49: #{soft_q_forward.1} parent=1 // pred_fallthru
      _
    %v76 = vld [vmem:[%s0] sm:$0xf]
    %v77 = vld [vmem:[%s0 + $0x4] sm:$0xf]
    %v78 = vld [vmem:[%s1] sm:$0xff]
    %v79 = vld [vmem:[%s1 + $0x8] sm:$0xff]
    %v80 = vld [vmem:[%s1 + $0x10] sm:$0xff]
    %v81 = vld [vmem:[%s2] sm:$0x3]
    %v83 = vlaneseq
    %v84 = vshrl.u32 %v83, 7
    %v85 = vsub.s32 0, %v84
    %v86 = vrot.slane %v81, %v85
    %v87 = vlaneseq
    %v88 = vshrl.u32 %v87, 7
    %v89 = vsub.s32 1, %v88
    %v90 = vrot.slane %v81, %v89
    %v95 = vunpack.c.l.b16 %v76
    %v96 = vunpack.c.l.b16 %v77
    %v97 = vpack.c.b16 %v96, %v95
    %v101 = vunpack.c.l.b16 %v78
    %v102 = vunpack.c.h.b16 %v78
    %v103 = vunpack.c.l.b16 %v79
    %v104 = vunpack.c.h.b16 %v79
    %v105 = vunpack.c.l.b16 %v80
    %v106 = vunpack.c.h.b16 %v80
    %v107 = vpack.c.b16 %v103, %v101
    %v108 = vpack.c.b16 %v104, %v102
    %v109 = vpack.c.b16 %v105, %v105
    %v110 = vpack.c.b16 %v106, %v106
    %vm113 = vcmask 187392
    %v115 = vsel %vm113, %v97, 0
    %vm117 = vcmask 1042432
    %vm118 = vcmask 1043456
    %v119 = vsel %vm117, 4294967295, 65535
    %v120 = vsel %vm118, %v119, 0
    %v122 = vand.u32 %v109, %v120
    %v125 = vand.u32 %v110, %v120
    %127 = vmatprep.subr.bf16.mxu0 %v108
    %128 = vmatpush1.bf16.msra.mxu0 %v107
    %129 = vmatprep.subr.bf16.mxu0 %v125
    %130 = vmatpush1.bf16.msra.mxu0 %v122
    %131 = vmatprep.subr.bf16.mxu0 0
    %132 = vmatpush1.bf16.msra.mxu0 0
    %133 = vmatprep.subr.bf16.mxu0 0
    %134 = vmatpush1.bf16.msra.mxu0 0
    %135 = vmatprep.subr.bf16.mxu0 0
    %136 = vmatpush1.bf16.msra.mxu0 0
    %137 = vmatprep.subr.bf16.mxu0 0
    %138 = vmatpush1.bf16.msra.mxu0 0
    %139 = vmatprep.subr.bf16.mxu0 0
    %140 = vmatpush1.bf16.msra.mxu0 0
    %141 = vmatprep.subr.bf16.mxu0 0
    %142 = vmatpush1.bf16.msra.mxu0 0
    %143 = vmatprep.subr.bf16.mxu0 0
    %144 = vmatpush1.bf16.msra.mxu0 0
    %145 = vmatprep.subr.bf16.mxu0 0
    %146 = vmatpush1.bf16.msra.mxu0 0
    %147 = vmatprep.subr.bf16.mxu0 0
    %148 = vmatpush1.bf16.msra.mxu0 0
    %149 = vmatprep.subr.bf16.mxu0 0
    %150 = vmatpush1.bf16.msra.mxu0 0
    %151 = vmatprep.subr.bf16.mxu0 0
    %152 = vmatpush1.bf16.msra.mxu0 0
    %153 = vmatprep.subr.bf16.mxu0 0
    %154 = vmatpush1.bf16.msra.mxu0 0
    %155 = vmatprep.subr.bf16.mxu0 0
    %156 = vmatpush1.bf16.msra.mxu0 0
    %157 = vmatprep.subr.bf16.mxu0 0
    %158 = vmatpush1.bf16.msra.mxu0 0
    %159 = vmatprep.mubr.bf16.mxu0 0
    %160 = vmatmul.mubr.bf16.gmra.mrb[0].mxu0 %v115
    %v161 = vpop.f32.mrb[0].mxu0
    %v162 = vadd.f32 %v86, %v161
    %v163 = vpop.f32.mrb[0].mxu0
    %v164 = vadd.f32 %v90, %v163
    %v165 = vpop.f32.mrb[0].mxu0
    %v166 = vadd.f32 %v86, %v165
    %v167 = vpop.f32.mrb[0].mxu0
    %v168 = vadd.f32 %v90, %v167
    %169 = vdwg.mxu0
    %v170 = vmax.f32 %v162, 0.0
    %v171 = vmax.f32 %v164, 0.0
    %v172 = vmax.f32 %v166, 0.0
    %v173 = vmax.f32 %v168, 0.0
    %v174 = vpack.c.bf16 %v172, %v170
    %v175 = vpack.c.bf16 %v173, %v171
    %v176 = vld [vmem:[#allocation3] sm:$0xff]
    %v177 = vld [vmem:[#allocation3 + $0x8] sm:$0xff]
    %v178 = vld [vmem:[#allocation3 + $0x10] sm:$0xff]
    %v179 = vld [vmem:[#allocation3 + $0x18] sm:$0xff]
    %v180 = vld [vmem:[#allocation3 + $0x20] sm:$0xff]
    %v181 = vld [vmem:[#allocation3 + $0x28] sm:$0xff]
    %v182 = vld [vmem:[#allocation3 + $0x30] sm:$0xff]
    %v183 = vld [vmem:[#allocation3 + $0x38] sm:$0xff]
    %v184 = vld [vmem:[#allocation3 + $0x40] sm:$0xff]
    %v185 = vld [vmem:[#allocation3 + $0x48] sm:$0xff]
    %v186 = vld [vmem:[#allocation3 + $0x50] sm:$0xff]
    %v187 = vld [vmem:[#allocation3 + $0x58] sm:$0xff]
    %v188 = vld [vmem:[#allocation3 + $0x60] sm:$0xff]
    %v189 = vld [vmem:[#allocation3 + $0x68] sm:$0xff]
    %v190 = vld [vmem:[#allocation3 + $0x70] sm:$0xff]
    %v191 = vld [vmem:[#allocation3 + $0x78] sm:$0xff]
    %v192 = vld [vmem:[#allocation3 + $0x80] sm:$0xff]
    %v193 = vld [vmem:[#allocation3 + $0x88] sm:$0xff]
    %v194 = vld [vmem:[#allocation3 + $0x90] sm:$0xff]
    %v195 = vld [vmem:[#allocation3 + $0x98] sm:$0xff]
    %v196 = vld [vmem:[#allocation3 + $0xa0] sm:$0xff]
    %v197 = vld [vmem:[#allocation3 + $0xa8] sm:$0xff]
    %v198 = vld [vmem:[#allocation3 + $0xb0] sm:$0xff]
    %v199 = vld [vmem:[#allocation3 + $0xb8] sm:$0xff]
    %v200 = vld [vmem:[#allocation3 + $0xc0] sm:$0xff]
    %v201 = vld [vmem:[#allocation3 + $0xc8] sm:$0xff]
    %v202 = vld [vmem:[#allocation3 + $0xd0] sm:$0xff]
    %v203 = vld [vmem:[#allocation3 + $0xd8] sm:$0xff]
    %v204 = vld [vmem:[#allocation3 + $0xe0] sm:$0xff]
    %v205 = vld [vmem:[#allocation3 + $0xe8] sm:$0xff]
    %v206 = vld [vmem:[#allocation3 + $0xf0] sm:$0xff]
    %v207 = vld [vmem:[#allocation3 + $0xf8] sm:$0xff]
    %v208 = vld [vmem:[%s4] sm:$0x3]
    %v210 = vlaneseq
    %v211 = vshrl.u32 %v210, 7
    %v212 = vsub.s32 0, %v211
    %v213 = vrot.slane %v208, %v212
    %v214 = vlaneseq
    %v215 = vshrl.u32 %v214, 7
    %v216 = vsub.s32 1, %v215
    %v217 = vrot.slane %v208, %v216
    %v252 = vunpack.c.l.b16 %v176
    %v253 = vunpack.c.h.b16 %v176
    %v254 = vunpack.c.l.b16 %v177
    %v255 = vunpack.c.h.b16 %v177
    %v256 = vunpack.c.l.b16 %v178
    %v257 = vunpack.c.h.b16 %v178
    %v258 = vunpack.c.l.b16 %v179
    %v259 = vunpack.c.h.b16 %v179
    %v260 = vunpack.c.l.b16 %v180
    %v261 = vunpack.c.h.b16 %v180
    %v262 = vunpack.c.l.b16 %v181
    %v263 = vunpack.c.h.b16 %v181
    %v264 = vunpack.c.l.b16 %v182
    %v265 = vunpack.c.h.b16 %v182
    %v266 = vunpack.c.l.b16 %v183
    %v267 = vunpack.c.h.b16 %v183
    %v268 = vunpack.c.l.b16 %v184
    %v269 = vunpack.c.h.b16 %v184
    %v270 = vunpack.c.l.b16 %v185
    %v271 = vunpack.c.h.b16 %v185
    %v272 = vunpack.c.l.b16 %v186
    %v273 = vunpack.c.h.b16 %v186
    %v274 = vunpack.c.l.b16 %v187
    %v275 = vunpack.c.h.b16 %v187
    %v276 = vunpack.c.l.b16 %v188
    %v277 = vunpack.c.h.b16 %v188
    %v278 = vunpack.c.l.b16 %v189
    %v279 = vunpack.c.h.b16 %v189
    %v280 = vunpack.c.l.b16 %v190
    %v281 = vunpack.c.h.b16 %v190
    %v282 = vunpack.c.l.b16 %v191
    %v283 = vunpack.c.h.b16 %v191
    %v284 = vunpack.c.l.b16 %v192
    %v285 = vunpack.c.h.b16 %v192
    %v286 = vunpack.c.l.b16 %v193
    %v287 = vunpack.c.h.b16 %v193
    %v288 = vunpack.c.l.b16 %v194
    %v289 = vunpack.c.h.b16 %v194
    %v290 = vunpack.c.l.b16 %v195
    %v291 = vunpack.c.h.b16 %v195
    %v292 = vunpack.c.l.b16 %v196
    %v293 = vunpack.c.h.b16 %v196
    %v294 = vunpack.c.l.b16 %v197
    %v295 = vunpack.c.h.b16 %v197
    %v296 = vunpack.c.l.b16 %v198
    %v297 = vunpack.c.h.b16 %v198
    %v298 = vunpack.c.l.b16 %v199
    %v299 = vunpack.c.h.b16 %v199
    %v300 = vunpack.c.l.b16 %v200
    %v301 = vunpack.c.h.b16 %v200
    %v302 = vunpack.c.l.b16 %v201
    %v303 = vunpack.c.h.b16 %v201
    %v304 = vunpack.c.l.b16 %v202
    %v305 = vunpack.c.h.b16 %v202
    %v306 = vunpack.c.l.b16 %v203
    %v307 = vunpack.c.h.b16 %v203
    %v308 = vunpack.c.l.b16 %v204
    %v309 = vunpack.c.h.b16 %v204
    %v310 = vunpack.c.l.b16 %v205
    %v311 = vunpack.c.h.b16 %v205
    %v312 = vunpack.c.l.b16 %v206
    %v313 = vunpack.c.h.b16 %v206
    %v314 = vunpack.c.l.b16 %v207
    %v315 = vunpack.c.h.b16 %v207
    %v316 = vpack.c.b16 %v254, %v252
    %v317 = vpack.c.b16 %v255, %v253
    %v318 = vpack.c.b16 %v258, %v256
    %v319 = vpack.c.b16 %v259, %v257
    %v320 = vpack.c.b16 %v262, %v260
    %v321 = vpack.c.b16 %v263, %v261
    %v322 = vpack.c.b16 %v266, %v264
    %v323 = vpack.c.b16 %v267, %v265
    %v324 = vpack.c.b16 %v270, %v268
    %v325 = vpack.c.b16 %v271, %v269
    %v326 = vpack.c.b16 %v274, %v272
    %v327 = vpack.c.b16 %v275, %v273
    %v328 = vpack.c.b16 %v278, %v276
    %v329 = vpack.c.b16 %v279, %v277
    %v330 = vpack.c.b16 %v282, %v280
    %v331 = vpack.c.b16 %v283, %v281
    %v332 = vpack.c.b16 %v286, %v284
    %v333 = vpack.c.b16 %v287, %v285
    %v334 = vpack.c.b16 %v290, %v288
    %v335 = vpack.c.b16 %v291, %v289
    %v336 = vpack.c.b16 %v294, %v292
    %v337 = vpack.c.b16 %v295, %v293
    %v338 = vpack.c.b16 %v298, %v296
    %v339 = vpack.c.b16 %v299, %v297
    %v340 = vpack.c.b16 %v302, %v300
    %v341 = vpack.c.b16 %v303, %v301
    %v342 = vpack.c.b16 %v306, %v304
    %v343 = vpack.c.b16 %v307, %v305
    %v344 = vpack.c.b16 %v310, %v308
    %v345 = vpack.c.b16 %v311, %v309
    %v346 = vpack.c.b16 %v314, %v312
    %v347 = vpack.c.b16 %v315, %v313
    %380 = vmatprep.subr.bf16.mxu0 %v317
    %381 = vmatpush1.bf16.msra.mxu0 %v316
    %382 = vmatprep.subr.bf16.mxu0 %v319
    %383 = vmatpush1.bf16.msra.mxu0 %v318
    %384 = vmatprep.subr.bf16.mxu0 %v321
    %385 = vmatpush1.bf16.msra.mxu0 %v320
    %386 = vmatprep.subr.bf16.mxu0 %v323
    %387 = vmatpush1.bf16.msra.mxu0 %v322
    %388 = vmatprep.subr.bf16.mxu0 %v325
    %389 = vmatpush1.bf16.msra.mxu0 %v324
    %390 = vmatprep.subr.bf16.mxu0 %v327
    %391 = vmatpush1.bf16.msra.mxu0 %v326
    %392 = vmatprep.subr.bf16.mxu0 %v329
    %393 = vmatpush1.bf16.msra.mxu0 %v328
    %394 = vmatprep.subr.bf16.mxu0 %v331
    %395 = vmatpush1.bf16.msra.mxu0 %v330
    %396 = vmatprep.subr.bf16.mxu0 %v333
    %397 = vmatpush1.bf16.msra.mxu0 %v332
    %398 = vmatprep.subr.bf16.mxu0 %v335
    %399 = vmatpush1.bf16.msra.mxu0 %v334
    %400 = vmatprep.subr.bf16.mxu0 %v337
    %401 = vmatpush1.bf16.msra.mxu0 %v336
    %402 = vmatprep.subr.bf16.mxu0 %v339
    %403 = vmatpush1.bf16.msra.mxu0 %v338
    %404 = vmatprep.subr.bf16.mxu0 %v341
    %405 = vmatpush1.bf16.msra.mxu0 %v340
    %406 = vmatprep.subr.bf16.mxu0 %v343
    %407 = vmatpush1.bf16.msra.mxu0 %v342
    %408 = vmatprep.subr.bf16.mxu0 %v345
    %409 = vmatpush1.bf16.msra.mxu0 %v344
    %410 = vmatprep.subr.bf16.mxu0 %v347
    %411 = vmatpush1.bf16.msra.mxu0 %v346
    %412 = vmatprep.mubr.bf16.mxu0 %v175
    %413 = vmatmul.mubr.bf16.gmra.mrb[0].mxu0 %v174
    %v414 = vpop.f32.mrb[0].mxu0
    %v415 = vadd.f32 %v213, %v414
    %v416 = vpop.f32.mrb[0].mxu0
    %v417 = vadd.f32 %v217, %v416
    %v418 = vpop.f32.mrb[0].mxu0
    %v419 = vadd.f32 %v213, %v418
    %v420 = vpop.f32.mrb[0].mxu0
    %v421 = vadd.f32 %v217, %v420
    %422 = vdwg.mxu0
    %v423 = vmax.f32 %v415, 0.0
    %v424 = vmax.f32 %v417, 0.0
    %v425 = vmax.f32 %v419, 0.0
    %v426 = vmax.f32 %v421, 0.0
    %v427 = vpack.c.bf16 %v425, %v423
    %v428 = vpack.c.bf16 %v426, %v424
    %v429 = vld [vmem:[#allocation5] sm:$0xff]
    %v430 = vld [vmem:[#allocation5 + $0x8] sm:$0xff]
    %v431 = vld [vmem:[#allocation5 + $0x10] sm:$0xff]
    %v432 = vld [vmem:[#allocation5 + $0x18] sm:$0xff]
    %v433 = vld [vmem:[#allocation5 + $0x20] sm:$0xff]
    %v434 = vld [vmem:[#allocation5 + $0x28] sm:$0xff]
    %v435 = vld [vmem:[#allocation5 + $0x30] sm:$0xff]
    %v436 = vld [vmem:[#allocation5 + $0x38] sm:$0xff]
    %v437 = vld [vmem:[#allocation5 + $0x40] sm:$0xff]
    %v438 = vld [vmem:[#allocation5 + $0x48] sm:$0xff]
    %v439 = vld [vmem:[#allocation5 + $0x50] sm:$0xff]
    %v440 = vld [vmem:[#allocation5 + $0x58] sm:$0xff]
    %v441 = vld [vmem:[#allocation5 + $0x60] sm:$0xff]
    %v442 = vld [vmem:[#allocation5 + $0x68] sm:$0xff]
    %v443 = vld [vmem:[#allocation5 + $0x70] sm:$0xff]
    %v444 = vld [vmem:[#allocation5 + $0x78] sm:$0xff]
    %v445 = vld [vmem:[#allocation5 + $0x80] sm:$0xff]
    %v446 = vld [vmem:[#allocation5 + $0x88] sm:$0xff]
    %v447 = vld [vmem:[#allocation5 + $0x90] sm:$0xff]
    %v448 = vld [vmem:[#allocation5 + $0x98] sm:$0xff]
    %v449 = vld [vmem:[#allocation5 + $0xa0] sm:$0xff]
    %v450 = vld [vmem:[#allocation5 + $0xa8] sm:$0xff]
    %v451 = vld [vmem:[#allocation5 + $0xb0] sm:$0xff]
    %v452 = vld [vmem:[#allocation5 + $0xb8] sm:$0xff]
    %v453 = vld [vmem:[#allocation5 + $0xc0] sm:$0xff]
    %v454 = vld [vmem:[#allocation5 + $0xc8] sm:$0xff]
    %v455 = vld [vmem:[#allocation5 + $0xd0] sm:$0xff]
    %v456 = vld [vmem:[#allocation5 + $0xd8] sm:$0xff]
    %v457 = vld [vmem:[#allocation5 + $0xe0] sm:$0xff]
    %v458 = vld [vmem:[#allocation5 + $0xe8] sm:$0xff]
    %v459 = vld [vmem:[#allocation5 + $0xf0] sm:$0xff]
    %v460 = vld [vmem:[#allocation5 + $0xf8] sm:$0xff]
    %v461 = vld [vmem:[%s6] sm:$0x3]
    %v463 = vlaneseq
    %v464 = vshrl.u32 %v463, 7
    %v465 = vsub.s32 0, %v464
    %v466 = vrot.slane %v461, %v465
    %v467 = vlaneseq
    %v468 = vshrl.u32 %v467, 7
    %v469 = vsub.s32 1, %v468
    %v470 = vrot.slane %v461, %v469
    %v505 = vunpack.c.l.b16 %v429
    %v506 = vunpack.c.h.b16 %v429
    %v507 = vunpack.c.l.b16 %v430
    %v508 = vunpack.c.h.b16 %v430
    %v509 = vunpack.c.l.b16 %v431
    %v510 = vunpack.c.h.b16 %v431
    %v511 = vunpack.c.l.b16 %v432
    %v512 = vunpack.c.h.b16 %v432
    %v513 = vunpack.c.l.b16 %v433
    %v514 = vunpack.c.h.b16 %v433
    %v515 = vunpack.c.l.b16 %v434
    %v516 = vunpack.c.h.b16 %v434
    %v517 = vunpack.c.l.b16 %v435
    %v518 = vunpack.c.h.b16 %v435
    %v519 = vunpack.c.l.b16 %v436
    %v520 = vunpack.c.h.b16 %v436
    %v521 = vunpack.c.l.b16 %v437
    %v522 = vunpack.c.h.b16 %v437
    %v523 = vunpack.c.l.b16 %v438
    %v524 = vunpack.c.h.b16 %v438
    %v525 = vunpack.c.l.b16 %v439
    %v526 = vunpack.c.h.b16 %v439
    %v527 = vunpack.c.l.b16 %v440
    %v528 = vunpack.c.h.b16 %v440
    %v529 = vunpack.c.l.b16 %v441
    %v530 = vunpack.c.h.b16 %v441
    %v531 = vunpack.c.l.b16 %v442
    %v532 = vunpack.c.h.b16 %v442
    %v533 = vunpack.c.l.b16 %v443
    %v534 = vunpack.c.h.b16 %v443
    %v535 = vunpack.c.l.b16 %v444
    %v536 = vunpack.c.h.b16 %v444
    %v537 = vunpack.c.l.b16 %v445
    %v538 = vunpack.c.h.b16 %v445
    %v539 = vunpack.c.l.b16 %v446
    %v540 = vunpack.c.h.b16 %v446
    %v541 = vunpack.c.l.b16 %v447
    %v542 = vunpack.c.h.b16 %v447
    %v543 = vunpack.c.l.b16 %v448
    %v544 = vunpack.c.h.b16 %v448
    %v545 = vunpack.c.l.b16 %v449
    %v546 = vunpack.c.h.b16 %v449
    %v547 = vunpack.c.l.b16 %v450
    %v548 = vunpack.c.h.b16 %v450
    %v549 = vunpack.c.l.b16 %v451
    %v550 = vunpack.c.h.b16 %v451
    %v551 = vunpack.c.l.b16 %v452
    %v552 = vunpack.c.h.b16 %v452
    %v553 = vunpack.c.l.b16 %v453
    %v554 = vunpack.c.h.b16 %v453
    %v555 = vunpack.c.l.b16 %v454
    %v556 = vunpack.c.h.b16 %v454
    %v557 = vunpack.c.l.b16 %v455
    %v558 = vunpack.c.h.b16 %v455
    %v559 = vunpack.c.l.b16 %v456
    %v560 = vunpack.c.h.b16 %v456
    %v561 = vunpack.c.l.b16 %v457
    %v562 = vunpack.c.h.b16 %v457
    %v563 = vunpack.c.l.b16 %v458
    %v564 = vunpack.c.h.b16 %v458
    %v565 = vunpack.c.l.b16 %v459
    %v566 = vunpack.c.h.b16 %v459
    %v567 = vunpack.c.l.b16 %v460
    %v568 = vunpack.c.h.b16 %v460
    %v569 = vpack.c.b16 %v507, %v505
    %v570 = vpack.c.b16 %v508, %v506
    %v571 = vpack.c.b16 %v511, %v509
    %v572 = vpack.c.b16 %v512, %v510
    %v573 = vpack.c.b16 %v515, %v513
    %v574 = vpack.c.b16 %v516, %v514
    %v575 = vpack.c.b16 %v519, %v517
    %v576 = vpack.c.b16 %v520, %v518
    %v577 = vpack.c.b16 %v523, %v521
    %v578 = vpack.c.b16 %v524, %v522
    %v579 = vpack.c.b16 %v527, %v525
    %v580 = vpack.c.b16 %v528, %v526
    %v581 = vpack.c.b16 %v531, %v529
    %v582 = vpack.c.b16 %v532, %v530
    %v583 = vpack.c.b16 %v535, %v533
    %v584 = vpack.c.b16 %v536, %v534
    %v585 = vpack.c.b16 %v539, %v537
    %v586 = vpack.c.b16 %v540, %v538
    %v587 = vpack.c.b16 %v543, %v541
    %v588 = vpack.c.b16 %v544, %v542
    %v589 = vpack.c.b16 %v547, %v545
    %v590 = vpack.c.b16 %v548, %v546
    %v591 = vpack.c.b16 %v551, %v549
    %v592 = vpack.c.b16 %v552, %v550
    %v593 = vpack.c.b16 %v555, %v553
    %v594 = vpack.c.b16 %v556, %v554
    %v595 = vpack.c.b16 %v559, %v557
    %v596 = vpack.c.b16 %v560, %v558
    %v597 = vpack.c.b16 %v563, %v561
    %v598 = vpack.c.b16 %v564, %v562
    %v599 = vpack.c.b16 %v567, %v565
    %v600 = vpack.c.b16 %v568, %v566
    %633 = vmatprep.subr.bf16.mxu0 %v570
    %634 = vmatpush1.bf16.msra.mxu0 %v569
    %635 = vmatprep.subr.bf16.mxu0 %v572
    %636 = vmatpush1.bf16.msra.mxu0 %v571
    %637 = vmatprep.subr.bf16.mxu0 %v574
    %638 = vmatpush1.bf16.msra.mxu0 %v573
    %639 = vmatprep.subr.bf16.mxu0 %v576
    %640 = vmatpush1.bf16.msra.mxu0 %v575
    %641 = vmatprep.subr.bf16.mxu0 %v578
    %642 = vmatpush1.bf16.msra.mxu0 %v577
    %643 = vmatprep.subr.bf16.mxu0 %v580
    %644 = vmatpush1.bf16.msra.mxu0 %v579
    %645 = vmatprep.subr.bf16.mxu0 %v582
    %646 = vmatpush1.bf16.msra.mxu0 %v581
    %647 = vmatprep.subr.bf16.mxu0 %v584
    %648 = vmatpush1.bf16.msra.mxu0 %v583
    %649 = vmatprep.subr.bf16.mxu0 %v586
    %650 = vmatpush1.bf16.msra.mxu0 %v585
    %651 = vmatprep.subr.bf16.mxu0 %v588
    %652 = vmatpush1.bf16.msra.mxu0 %v587
    %653 = vmatprep.subr.bf16.mxu0 %v590
    %654 = vmatpush1.bf16.msra.mxu0 %v589
    %655 = vmatprep.subr.bf16.mxu0 %v592
    %656 = vmatpush1.bf16.msra.mxu0 %v591
    %657 = vmatprep.subr.bf16.mxu0 %v594
    %658 = vmatpush1.bf16.msra.mxu0 %v593
    %659 = vmatprep.subr.bf16.mxu0 %v596
    %660 = vmatpush1.bf16.msra.mxu0 %v595
    %661 = vmatprep.subr.bf16.mxu0 %v598
    %662 = vmatpush1.bf16.msra.mxu0 %v597
    %663 = vmatprep.subr.bf16.mxu0 %v600
    %664 = vmatpush1.bf16.msra.mxu0 %v599
    %665 = vmatprep.mubr.bf16.mxu0 %v428
    %666 = vmatmul.mubr.bf16.gmra.mrb[0].mxu0 %v427
    %v667 = vpop.f32.mrb[0].mxu0
    %v668 = vadd.f32 %v466, %v667
    %v669 = vpop.f32.mrb[0].mxu0
    %v670 = vadd.f32 %v470, %v669
    %v671 = vpop.f32.mrb[0].mxu0
    %v672 = vadd.f32 %v466, %v671
    %v673 = vpop.f32.mrb[0].mxu0
    %v674 = vadd.f32 %v470, %v673
    %675 = vdwg.mxu0
    %v676 = vmax.f32 %v668, 0.0
    %v677 = vmax.f32 %v670, 0.0
    %v678 = vmax.f32 %v672, 0.0
    %v679 = vmax.f32 %v674, 0.0
    %v680 = vpack.c.bf16 %v678, %v676
    %v681 = vpack.c.bf16 %v679, %v677
    %v682 = vld [vmem:[#allocation7] sm:$0xf]
    %v683 = vld [vmem:[#allocation7 + $0x4] sm:$0xf]
    %v684 = vld [vmem:[#allocation7 + $0x8] sm:$0xf]
    %v685 = vld [vmem:[#allocation7 + $0xc] sm:$0xf]
    %v686 = vld [vmem:[#allocation7 + $0x10] sm:$0xf]
    %v687 = vld [vmem:[#allocation7 + $0x14] sm:$0xf]
    %v688 = vld [vmem:[#allocation7 + $0x18] sm:$0xf]
    %v689 = vld [vmem:[#allocation7 + $0x1c] sm:$0xf]
    %v690 = vld [vmem:[#allocation7 + $0x20] sm:$0xf]
    %v691 = vld [vmem:[#allocation7 + $0x24] sm:$0xf]
    %v692 = vld [vmem:[#allocation7 + $0x28] sm:$0xf]
    %v693 = vld [vmem:[#allocation7 + $0x2c] sm:$0xf]
    %v694 = vld [vmem:[#allocation7 + $0x30] sm:$0xf]
    %v695 = vld [vmem:[#allocation7 + $0x34] sm:$0xf]
    %v696 = vld [vmem:[#allocation7 + $0x38] sm:$0xf]
    %v697 = vld [vmem:[#allocation7 + $0x3c] sm:$0xf]
    %v698 = vld [vmem:[#allocation7 + $0x40] sm:$0xf]
    %v699 = vld [vmem:[#allocation7 + $0x44] sm:$0xf]
    %v700 = vld [vmem:[#allocation7 + $0x48] sm:$0xf]
    %v701 = vld [vmem:[#allocation7 + $0x4c] sm:$0xf]
    %v702 = vld [vmem:[#allocation7 + $0x50] sm:$0xf]
    %v703 = vld [vmem:[#allocation7 + $0x54] sm:$0xf]
    %v704 = vld [vmem:[#allocation7 + $0x58] sm:$0xf]
    %v705 = vld [vmem:[#allocation7 + $0x5c] sm:$0xf]
    %v706 = vld [vmem:[#allocation7 + $0x60] sm:$0xf]
    %v707 = vld [vmem:[#allocation7 + $0x64] sm:$0xf]
    %v708 = vld [vmem:[#allocation7 + $0x68] sm:$0xf]
    %v709 = vld [vmem:[#allocation7 + $0x6c] sm:$0xf]
    %v710 = vld [vmem:[#allocation7 + $0x70] sm:$0xf]
    %v711 = vld [vmem:[#allocation7 + $0x74] sm:$0xf]
    %v712 = vld [vmem:[#allocation7 + $0x78] sm:$0xf]
    %v713 = vld [vmem:[#allocation7 + $0x7c] sm:$0xf]
    %v746 = vunpack.c.l.b16 %v682
    %v747 = vunpack.c.l.b16 %v683
    %v748 = vunpack.c.l.b16 %v684
    %v749 = vunpack.c.l.b16 %v685
    %v750 = vunpack.c.l.b16 %v686
    %v751 = vunpack.c.l.b16 %v687
    %v752 = vunpack.c.l.b16 %v688
    %v753 = vunpack.c.l.b16 %v689
    %v754 = vunpack.c.l.b16 %v690
    %v755 = vunpack.c.l.b16 %v691
    %v756 = vunpack.c.l.b16 %v692
    %v757 = vunpack.c.l.b16 %v693
    %v758 = vunpack.c.l.b16 %v694
    %v759 = vunpack.c.l.b16 %v695
    %v760 = vunpack.c.l.b16 %v696
    %v761 = vunpack.c.l.b16 %v697
    %v762 = vunpack.c.l.b16 %v698
    %v763 = vunpack.c.l.b16 %v699
    %v764 = vunpack.c.l.b16 %v700
    %v765 = vunpack.c.l.b16 %v701
    %v766 = vunpack.c.l.b16 %v702
    %v767 = vunpack.c.l.b16 %v703
    %v768 = vunpack.c.l.b16 %v704
    %v769 = vunpack.c.l.b16 %v705
    %v770 = vunpack.c.l.b16 %v706
    %v771 = vunpack.c.l.b16 %v707
    %v772 = vunpack.c.l.b16 %v708
    %v773 = vunpack.c.l.b16 %v709
    %v774 = vunpack.c.l.b16 %v710
    %v775 = vunpack.c.l.b16 %v711
    %v776 = vunpack.c.l.b16 %v712
    %v777 = vunpack.c.l.b16 %v713
    %v778 = vpack.c.b16 %v747, %v746
    %v779 = vpack.c.b16 %v749, %v748
    %v780 = vpack.c.b16 %v751, %v750
    %v781 = vpack.c.b16 %v753, %v752
    %v782 = vpack.c.b16 %v755, %v754
    %v783 = vpack.c.b16 %v757, %v756
    %v784 = vpack.c.b16 %v759, %v758
    %v785 = vpack.c.b16 %v761, %v760
    %v786 = vpack.c.b16 %v763, %v762
    %v787 = vpack.c.b16 %v765, %v764
    %v788 = vpack.c.b16 %v767, %v766
    %v789 = vpack.c.b16 %v769, %v768
    %v790 = vpack.c.b16 %v771, %v770
    %v791 = vpack.c.b16 %v773, %v772
    %v792 = vpack.c.b16 %v775, %v774
    %v793 = vpack.c.b16 %v777, %v776
    %810 = vmatprep.subr.bf16.mxu0 0
    %811 = vmatpush1.bf16.msra.mxu0 %v778
    %812 = vmatprep.subr.bf16.mxu0 0
    %813 = vmatpush1.bf16.msra.mxu0 %v779
    %814 = vmatprep.subr.bf16.mxu0 0
    %815 = vmatpush1.bf16.msra.mxu0 %v780
    %816 = vmatprep.subr.bf16.mxu0 0
    %817 = vmatpush1.bf16.msra.mxu0 %v781
    %818 = vmatprep.subr.bf16.mxu0 0
    %819 = vmatpush1.bf16.msra.mxu0 %v782
    %820 = vmatprep.subr.bf16.mxu0 0
    %821 = vmatpush1.bf16.msra.mxu0 %v783
    %822 = vmatprep.subr.bf16.mxu0 0
    %823 = vmatpush1.bf16.msra.mxu0 %v784
    %824 = vmatprep.subr.bf16.mxu0 0
    %825 = vmatpush1.bf16.msra.mxu0 %v785
    %826 = vmatprep.subr.bf16.mxu0 0
    %827 = vmatpush1.bf16.msra.mxu0 %v786
    %828 = vmatprep.subr.bf16.mxu0 0
    %829 = vmatpush1.bf16.msra.mxu0 %v787
    %830 = vmatprep.subr.bf16.mxu0 0
    %831 = vmatpush1.bf16.msra.mxu0 %v788
    %832 = vmatprep.subr.bf16.mxu0 0
    %833 = vmatpush1.bf16.msra.mxu0 %v789
    %834 = vmatprep.subr.bf16.mxu0 0
    %835 = vmatpush1.bf16.msra.mxu0 %v790
    %836 = vmatprep.subr.bf16.mxu0 0
    %837 = vmatpush1.bf16.msra.mxu0 %v791
    %838 = vmatprep.subr.bf16.mxu0 0
    %839 = vmatpush1.bf16.msra.mxu0 %v792
    %840 = vmatprep.subr.bf16.mxu0 0
    %841 = vmatpush1.bf16.msra.mxu0 %v793
    %842 = vmatprep.mubr.bf16.mxu0 %v681
    %843 = vmatmul.mubr.bf16.gmra.mrb[0].mxu0 %v680
    %v844 = vpop.f32.mrb[0].mxu0
    %v845 = vadd.f32 0.0, %v844
    %v846 = vpop.f32.mrb[0].mxu0
    %v847 = vpop.f32.mrb[0].mxu0
    %v848 = vadd.f32 0.0, %v847
    %v849 = vpop.f32.mrb[0].mxu0
    %850 = vdwg.mxu0
    %v851 = vld [vmem:[#allocation2] sm:$0x1]
    %v853 = vlaneseq
    %v854 = vshrl.u32 %v853, 7
    %v855 = vsub.s32 0, %v854
    %v856 = vrot.slane %v851, %v855
    %v858 = vadd.f32 %v845, %v856
    %v859 = vadd.f32 %v848, %v856
    %vm860 = vcmask 7168
    %861 = vst.msk [vmem:[%s9] sm:$0xff] %vm860, %v858
    %862 = vst.msk [vmem:[%s9 + $0x8] sm:$0xff] %vm860, %v859
    // Predicated region
    $region50: #{soft_q_forward.1} parent=1 // pred_check
      _
    $region51: #{soft_q_forward.1} parent=1 // pred_check_branch
      %864 = sbr.rel (0) target = $region53
    $region52: #{soft_q_forward.1} parent=1 // pred_region
      _
    $region53: #{soft_q_forward.1} parent=1 // pred_fallthru
      _
    // Predicated region
    $region54: #{soft_q_forward.1} parent=1 // pred_check
      _
    $region55: #{soft_q_forward.1} parent=1 // pred_check_branch
      %866 = sbr.rel (0) target = $region57
    $region56: #{soft_q_forward.1} parent=1 // pred_region
      _
    $region57: #{soft_q_forward.1} parent=1 // pred_fallthru
      _
    %867 = vsyncpa [#allocation4], 1
    %868 = vsyncpa [#allocation6], 1

</llo_original>
